<compile_context>
chip_gen: v5e
topology: v5e:2x2
jax: 0.10.0
libtpu: 0.0.40
codegen_flags: <defaults>
</compile_context>

<pallas_src>
import functools

import jax
import jax.numpy as jnp
from jax import lax
from jax.experimental import pallas as pl
from jax.experimental.pallas import tpu as pltpu


def _lstm_fc_kernel(x_ref, whh_ref, sp_ref, out_ref, *, seq_len, batch, hidden):
    """Whole-sequence LSTM + final Linear, everything resident in VMEM.

    x_ref   : (T*Bp, 1)   time-major input, flattened over (T, Bp)
    whh_ref : (H, 4H)     recurrent weight, pre-transposed
    sp_ref  : (6, 4H)     packed small params:
                          row0 w_ih row, row1 b_ih+b_hh, row2 act scale,
                          row3 act shift, row4 fc_w row (first H lanes),
                          row5 fc_b (lane 0)
    out_ref : (Bp, 1)
    """
    H = hidden

    wih_row = sp_ref[0:1, :]          # (1, 4H)
    bias = sp_ref[1:2, :]             # (1, 4H)
    scale = sp_ref[2:3, :]            # (1, 4H): 0.5 on i/f/o lanes, 1.0 on g
    shift = sp_ref[3:4, :]            # (1, 4H): 0.5 on i/f/o lanes, 0.0 on g
    fcw_row = sp_ref[4:5, 0:H]        # (1, H)
    fcb = sp_ref[5:6, 0:1]            # (1, 1)

    # ---- Hoisted input projection (I == 1: VPU outer product, no MXU) ------
    xw = x_ref[...] * wih_row + bias                     # (T*Bp, 4H)

    whh = whh_ref[...]                                   # (H, 4H), loaded once

    h = jnp.zeros((batch, H), jnp.float32)
    c = jnp.zeros((batch, H), jnp.float32)

    # ---- Recurrence: statically unrolled over T (small, fixed) -------------
    for t in range(seq_len):
        gates = xw[t * batch:(t + 1) * batch, :] + jnp.dot(
            h, whh, preferred_element_type=jnp.float32)  # (Bp, 4H)
        # Single EUP push per step: sigma(x) = 0.5*tanh(x/2) + 0.5 (exact),
        # tanh(x) = 1.0*tanh(x) + 0.0 — selected per lane by scale/shift.
        t_act = jnp.tanh(gates * scale)
        act = t_act * scale + shift                      # (Bp, 4H)
        i_g = act[:, 0:H]
        f_g = act[:, H:2 * H]
        g_g = act[:, 2 * H:3 * H]
        o_g = act[:, 3 * H:4 * H]
        c = f_g * c + i_g * g_g
        h = o_g * jnp.tanh(c)

    # ---- Final Linear (O == 1): VPU multiply + lane reduce, no MXU tail ----
    out_ref[...] = jnp.sum(h * fcw_row, axis=-1, keepdims=True) + fcb


def prepare_params(params):
    """One-time transform of PyTorch-layout params into kernel-ready arrays."""
    w_ih = params["w_ih"]        # (4H, I)
    w_hh = params["w_hh"]        # (4H, H)
    b_ih = params["b_ih"]        # (4H,)
    b_hh = params["b_hh"]        # (4H,)
    fc_w = params["fc_w"]        # (O, H)
    fc_b = params["fc_b"]        # (O,)
    H = w_hh.shape[1]
    G = 4 * H
    I = w_ih.shape[1]
    O = fc_w.shape[0]
    assert I == 1 and O == 1, "kernel specializes to input_size=1, output_size=1"

    wih_row = w_ih.reshape(G).astype(jnp.float32)                  # (4H,)
    bias = (b_ih + b_hh).astype(jnp.float32)                       # (4H,)
    lane = jnp.arange(G)
    g_lane = jnp.logical_and(lane >= 2 * H, lane < 3 * H)
    scale = jnp.where(g_lane, 1.0, 0.5).astype(jnp.float32)        # (4H,)
    shift = jnp.where(g_lane, 0.0, 0.5).astype(jnp.float32)        # (4H,)
    fcw_pad = jnp.zeros((G,), jnp.float32).at[:H].set(
        fc_w.reshape(H).astype(jnp.float32))                       # (4H,)
    fcb_pad = jnp.zeros((G,), jnp.float32).at[0].set(
        fc_b.reshape(()).astype(jnp.float32))                      # (4H,)
    small = jnp.stack([wih_row, bias, scale, shift, fcw_pad, fcb_pad], axis=0)

    whh_t = jnp.transpose(w_hh).astype(jnp.float32)                # (H, 4H)
    return {"whh_t": whh_t, "small": small}


@jax.jit
def stock_predictor_forward(x, prepared):
    """x: (B, T, 1) float32 (batch_first, like PyTorch). Returns (B, 1)."""
    whh_t = prepared["whh_t"]        # (H, 4H)
    small = prepared["small"]        # (6, 4H)
    H = whh_t.shape[0]
    B, T, I = x.shape

    # Pad batch to the f32 (8,128) sublane tile so per-step slices are aligned
    # and every gate op is full-vreg; padded rows are sliced off at the end.
    Bp = ((B + 7) // 8) * 8
    x_tm = jnp.transpose(x, (1, 0, 2)).astype(jnp.float32)         # (T, B, I)
    if Bp != B:
        x_tm = jnp.pad(x_tm, ((0, 0), (0, Bp - B), (0, 0)))
    x_2d = x_tm.reshape(T * Bp, I)                                 # (T*Bp, I)

    vmem = pl.BlockSpec(memory_space=pltpu.MemorySpace.VMEM)
    kernel = functools.partial(_lstm_fc_kernel, seq_len=T, batch=Bp, hidden=H)
    out_p = pl.pallas_call(
        kernel,
        out_shape=jax.ShapeDtypeStruct((Bp, 1), jnp.float32),
        in_specs=[vmem, vmem, vmem],
        out_specs=vmem,
    )(x_2d, whh_t, small)
    return out_p[:B]


def _reference_forward(x, params):
    """Pure-JAX reference matching PyTorch nn.LSTM + nn.Linear semantics."""
    w_ih, w_hh = params["w_ih"], params["w_hh"]
    b_ih, b_hh = params["b_ih"], params["b_hh"]
    fc_w, fc_b = params["fc_w"], params["fc_b"]
    B, T, _ = x.shape
    H = w_hh.shape[1]
    h = jnp.zeros((B, H), jnp.float32)
    c = jnp.zeros((B, H), jnp.float32)

    def step(carry, x_t):
        h, c = carry
        gates = x_t @ w_ih.T + b_ih + h @ w_hh.T + b_hh
        i = jax.nn.sigmoid(gates[:, 0:H])
        f = jax.nn.sigmoid(gates[:, H:2 * H])
        g = jnp.tanh(gates[:, 2 * H:3 * H])
        o = jax.nn.sigmoid(gates[:, 3 * H:4 * H])
        c = f * c + i * g
        h = o * jnp.tanh(c)
        return (h, c), None

    (h, c), _ = lax.scan(step, (h, c), jnp.transpose(x, (1, 0, 2)))
    return h @ fc_w.T + fc_b


def init_params(key, input_size, hidden_size, output_size):
    """Deterministic synthetic init (PyTorch-like uniform(-1/sqrt(H), 1/sqrt(H)))."""
    ks = jax.random.split(key, 6)
    k = 1.0 / jnp.sqrt(hidden_size)
    u = lambda kk, shape: jax.random.uniform(kk, shape, jnp.float32, -k, k)
    return {
        "w_ih": u(ks[0], (4 * hidden_size, input_size)),
        "w_hh": u(ks[1], (4 * hidden_size, hidden_size)),
        "b_ih": u(ks[2], (4 * hidden_size,)),
        "b_hh": u(ks[3], (4 * hidden_size,)),
        "fc_w": u(ks[4], (output_size, hidden_size)),
        "fc_b": u(ks[5], (output_size,)),
    }


if __name__ == "__main__":
    batch, seq, input_size, hidden, output_size = 4, 8, 1, 32, 1

    key = jax.random.PRNGKey(0)
    k_x, k_p = jax.random.split(key)
    x = jax.random.normal(k_x, (batch, seq, input_size), jnp.float32)
    params = init_params(k_p, input_size, hidden, output_size)

    prepared = prepare_params(params)          # one-time param prep
    out = stock_predictor_forward(x, prepared)  # jitted per-call path
    out = jax.block_until_ready(out)

    ref = _reference_forward(x, params)
    assert out.shape == (batch, output_size)
    assert jnp.allclose(out, ref, atol=1e-4, rtol=1e-4), (out, ref)
    print("KERNEL_OK")
</pallas_src>

<mosaic_0001>
module attributes {stable_mosaic.version = 11 : i64} {
  func.func @_lstm_fc_kernel(%arg0: memref<64x1xf32, #tpu.memory_space<vmem>>, %arg1: memref<32x128xf32, #tpu.memory_space<vmem>>, %arg2: memref<6x128xf32, #tpu.memory_space<vmem>>, %arg3: memref<8x1xf32, #tpu.memory_space<vmem>>) attributes {dimension_semantics = [], scalar_prefetch = 0 : i64, scratch_operands = 0 : i64, tpu.core_type = #tpu.core_type<tc>} {
    %c0 = arith.constant 0 : index
    %c0_0 = arith.constant 0 : index
    %0 = vector.load %arg2[%c0, %c0_0] : memref<6x128xf32, #tpu.memory_space<vmem>>, vector<1x128xf32>
    %c1 = arith.constant 1 : index
    %c0_1 = arith.constant 0 : index
    %1 = vector.load %arg2[%c1, %c0_1] : memref<6x128xf32, #tpu.memory_space<vmem>>, vector<1x128xf32>
    %c2 = arith.constant 2 : index
    %c0_2 = arith.constant 0 : index
    %2 = vector.load %arg2[%c2, %c0_2] : memref<6x128xf32, #tpu.memory_space<vmem>>, vector<1x128xf32>
    %c3 = arith.constant 3 : index
    %c0_3 = arith.constant 0 : index
    %3 = vector.load %arg2[%c3, %c0_3] : memref<6x128xf32, #tpu.memory_space<vmem>>, vector<1x128xf32>
    %c4 = arith.constant 4 : index
    %c0_4 = arith.constant 0 : index
    %4 = vector.load %arg2[%c4, %c0_4] : memref<6x128xf32, #tpu.memory_space<vmem>>, vector<1x32xf32>
    %c5 = arith.constant 5 : index
    %c0_5 = arith.constant 0 : index
    %5 = vector.load %arg2[%c5, %c0_5] : memref<6x128xf32, #tpu.memory_space<vmem>>, vector<1x1xf32>
    %c0_6 = arith.constant 0 : index
    %c0_7 = arith.constant 0 : index
    %6 = vector.load %arg0[%c0_6, %c0_7] : memref<64x1xf32, #tpu.memory_space<vmem>>, vector<64x1xf32>
    %7 = vector.broadcast %6 : vector<64x1xf32> to vector<64x128xf32>
    %8 = vector.broadcast %0 : vector<1x128xf32> to vector<64x128xf32>
    %9 = arith.mulf %7, %8 : vector<64x128xf32>
    %10 = vector.broadcast %1 : vector<1x128xf32> to vector<64x128xf32>
    %11 = arith.addf %9, %10 : vector<64x128xf32>
    %c0_8 = arith.constant 0 : index
    %c0_9 = arith.constant 0 : index
    %12 = vector.load %arg1[%c0_8, %c0_9] : memref<32x128xf32, #tpu.memory_space<vmem>>, vector<32x128xf32>
    %cst = arith.constant 0.000000e+00 : f32
    %13 = vector.broadcast %cst : f32 to vector<8x32xf32>
    %cst_10 = arith.constant 0.000000e+00 : f32
    %14 = vector.broadcast %cst_10 : f32 to vector<8x32xf32>
    %15 = vector.extract_strided_slice %11 {offsets = [0, 0], sizes = [8, 128], strides = [1, 1]} : vector<64x128xf32> to vector<8x128xf32>
    %cst_11 = arith.constant dense<0.000000e+00> : vector<8x128xf32>
    %16 = tpu.matmul %13, %12, %cst_11 {dimension_numbers = #tpu.dot_dimension_numbers<[1], [0], [0], [1], [0, 0, 1, 1], [], []>} : vector<8x32xf32>, vector<32x128xf32>, vector<8x128xf32> -> vector<8x128xf32>
    %17 = arith.addf %15, %16 : vector<8x128xf32>
    %18 = vector.broadcast %2 : vector<1x128xf32> to vector<8x128xf32>
    %19 = arith.mulf %17, %18 : vector<8x128xf32>
    %20 = math.tanh %19 : vector<8x128xf32>
    %21 = vector.broadcast %2 : vector<1x128xf32> to vector<8x128xf32>
    %22 = arith.mulf %20, %21 : vector<8x128xf32>
    %23 = vector.broadcast %3 : vector<1x128xf32> to vector<8x128xf32>
    %24 = arith.addf %22, %23 : vector<8x128xf32>
    %25 = vector.extract_strided_slice %24 {offsets = [0, 0], sizes = [8, 32], strides = [1, 1]} : vector<8x128xf32> to vector<8x32xf32>
    %26 = vector.extract_strided_slice %24 {offsets = [0, 32], sizes = [8, 32], strides = [1, 1]} : vector<8x128xf32> to vector<8x32xf32>
    %27 = vector.extract_strided_slice %24 {offsets = [0, 64], sizes = [8, 32], strides = [1, 1]} : vector<8x128xf32> to vector<8x32xf32>
    %28 = vector.extract_strided_slice %24 {offsets = [0, 96], sizes = [8, 32], strides = [1, 1]} : vector<8x128xf32> to vector<8x32xf32>
    %29 = arith.mulf %26, %14 : vector<8x32xf32>
    %30 = arith.mulf %25, %27 : vector<8x32xf32>
    %31 = arith.addf %29, %30 : vector<8x32xf32>
    %32 = math.tanh %31 : vector<8x32xf32>
    %33 = arith.mulf %28, %32 : vector<8x32xf32>
    %34 = vector.extract_strided_slice %11 {offsets = [8, 0], sizes = [8, 128], strides = [1, 1]} : vector<64x128xf32> to vector<8x128xf32>
    %cst_12 = arith.constant dense<0.000000e+00> : vector<8x128xf32>
    %35 = tpu.matmul %33, %12, %cst_12 {dimension_numbers = #tpu.dot_dimension_numbers<[1], [0], [0], [1], [0, 0, 1, 1], [], []>} : vector<8x32xf32>, vector<32x128xf32>, vector<8x128xf32> -> vector<8x128xf32>
    %36 = arith.addf %34, %35 : vector<8x128xf32>
    %37 = vector.broadcast %2 : vector<1x128xf32> to vector<8x128xf32>
    %38 = arith.mulf %36, %37 : vector<8x128xf32>
    %39 = math.tanh %38 : vector<8x128xf32>
    %40 = vector.broadcast %2 : vector<1x128xf32> to vector<8x128xf32>
    %41 = arith.mulf %39, %40 : vector<8x128xf32>
    %42 = vector.broadcast %3 : vector<1x128xf32> to vector<8x128xf32>
    %43 = arith.addf %41, %42 : vector<8x128xf32>
    %44 = vector.extract_strided_slice %43 {offsets = [0, 0], sizes = [8, 32], strides = [1, 1]} : vector<8x128xf32> to vector<8x32xf32>
    %45 = vector.extract_strided_slice %43 {offsets = [0, 32], sizes = [8, 32], strides = [1, 1]} : vector<8x128xf32> to vector<8x32xf32>
    %46 = vector.extract_strided_slice %43 {offsets = [0, 64], sizes = [8, 32], strides = [1, 1]} : vector<8x128xf32> to vector<8x32xf32>
    %47 = vector.extract_strided_slice %43 {offsets = [0, 96], sizes = [8, 32], strides = [1, 1]} : vector<8x128xf32> to vector<8x32xf32>
    %48 = arith.mulf %45, %31 : vector<8x32xf32>
    %49 = arith.mulf %44, %46 : vector<8x32xf32>
    %50 = arith.addf %48, %49 : vector<8x32xf32>
    %51 = math.tanh %50 : vector<8x32xf32>
    %52 = arith.mulf %47, %51 : vector<8x32xf32>
    %53 = vector.extract_strided_slice %11 {offsets = [16, 0], sizes = [8, 128], strides = [1, 1]} : vector<64x128xf32> to vector<8x128xf32>
    %cst_13 = arith.constant dense<0.000000e+00> : vector<8x128xf32>
    %54 = tpu.matmul %52, %12, %cst_13 {dimension_numbers = #tpu.dot_dimension_numbers<[1], [0], [0], [1], [0, 0, 1, 1], [], []>} : vector<8x32xf32>, vector<32x128xf32>, vector<8x128xf32> -> vector<8x128xf32>
    %55 = arith.addf %53, %54 : vector<8x128xf32>
    %56 = vector.broadcast %2 : vector<1x128xf32> to vector<8x128xf32>
    %57 = arith.mulf %55, %56 : vector<8x128xf32>
    %58 = math.tanh %57 : vector<8x128xf32>
    %59 = vector.broadcast %2 : vector<1x128xf32> to vector<8x128xf32>
    %60 = arith.mulf %58, %59 : vector<8x128xf32>
    %61 = vector.broadcast %3 : vector<1x128xf32> to vector<8x128xf32>
    %62 = arith.addf %60, %61 : vector<8x128xf32>
    %63 = vector.extract_strided_slice %62 {offsets = [0, 0], sizes = [8, 32], strides = [1, 1]} : vector<8x128xf32> to vector<8x32xf32>
    %64 = vector.extract_strided_slice %62 {offsets = [0, 32], sizes = [8, 32], strides = [1, 1]} : vector<8x128xf32> to vector<8x32xf32>
    %65 = vector.extract_strided_slice %62 {offsets = [0, 64], sizes = [8, 32], strides = [1, 1]} : vector<8x128xf32> to vector<8x32xf32>
    %66 = vector.extract_strided_slice %62 {offsets = [0, 96], sizes = [8, 32], strides = [1, 1]} : vector<8x128xf32> to vector<8x32xf32>
    %67 = arith.mulf %64, %50 : vector<8x32xf32>
    %68 = arith.mulf %63, %65 : vector<8x32xf32>
    %69 = arith.addf %67, %68 : vector<8x32xf32>
    %70 = math.tanh %69 : vector<8x32xf32>
    %71 = arith.mulf %66, %70 : vector<8x32xf32>
    %72 = vector.extract_strided_slice %11 {offsets = [24, 0], sizes = [8, 128], strides = [1, 1]} : vector<64x128xf32> to vector<8x128xf32>
    %cst_14 = arith.constant dense<0.000000e+00> : vector<8x128xf32>
    %73 = tpu.matmul %71, %12, %cst_14 {dimension_numbers = #tpu.dot_dimension_numbers<[1], [0], [0], [1], [0, 0, 1, 1], [], []>} : vector<8x32xf32>, vector<32x128xf32>, vector<8x128xf32> -> vector<8x128xf32>
    %74 = arith.addf %72, %73 : vector<8x128xf32>
    %75 = vector.broadcast %2 : vector<1x128xf32> to vector<8x128xf32>
    %76 = arith.mulf %74, %75 : vector<8x128xf32>
    %77 = math.tanh %76 : vector<8x128xf32>
    %78 = vector.broadcast %2 : vector<1x128xf32> to vector<8x128xf32>
    %79 = arith.mulf %77, %78 : vector<8x128xf32>
    %80 = vector.broadcast %3 : vector<1x128xf32> to vector<8x128xf32>
    %81 = arith.addf %79, %80 : vector<8x128xf32>
    %82 = vector.extract_strided_slice %81 {offsets = [0, 0], sizes = [8, 32], strides = [1, 1]} : vector<8x128xf32> to vector<8x32xf32>
    %83 = vector.extract_strided_slice %81 {offsets = [0, 32], sizes = [8, 32], strides = [1, 1]} : vector<8x128xf32> to vector<8x32xf32>
    %84 = vector.extract_strided_slice %81 {offsets = [0, 64], sizes = [8, 32], strides = [1, 1]} : vector<8x128xf32> to vector<8x32xf32>
    %85 = vector.extract_strided_slice %81 {offsets = [0, 96], sizes = [8, 32], strides = [1, 1]} : vector<8x128xf32> to vector<8x32xf32>
    %86 = arith.mulf %83, %69 : vector<8x32xf32>
    %87 = arith.mulf %82, %84 : vector<8x32xf32>
    %88 = arith.addf %86, %87 : vector<8x32xf32>
    %89 = math.tanh %88 : vector<8x32xf32>
    %90 = arith.mulf %85, %89 : vector<8x32xf32>
    %91 = vector.extract_strided_slice %11 {offsets = [32, 0], sizes = [8, 128], strides = [1, 1]} : vector<64x128xf32> to vector<8x128xf32>
    %cst_15 = arith.constant dense<0.000000e+00> : vector<8x128xf32>
    %92 = tpu.matmul %90, %12, %cst_15 {dimension_numbers = #tpu.dot_dimension_numbers<[1], [0], [0], [1], [0, 0, 1, 1], [], []>} : vector<8x32xf32>, vector<32x128xf32>, vector<8x128xf32> -> vector<8x128xf32>
    %93 = arith.addf %91, %92 : vector<8x128xf32>
    %94 = vector.broadcast %2 : vector<1x128xf32> to vector<8x128xf32>
    %95 = arith.mulf %93, %94 : vector<8x128xf32>
    %96 = math.tanh %95 : vector<8x128xf32>
    %97 = vector.broadcast %2 : vector<1x128xf32> to vector<8x128xf32>
    %98 = arith.mulf %96, %97 : vector<8x128xf32>
    %99 = vector.broadcast %3 : vector<1x128xf32> to vector<8x128xf32>
    %100 = arith.addf %98, %99 : vector<8x128xf32>
    %101 = vector.extract_strided_slice %100 {offsets = [0, 0], sizes = [8, 32], strides = [1, 1]} : vector<8x128xf32> to vector<8x32xf32>
    %102 = vector.extract_strided_slice %100 {offsets = [0, 32], sizes = [8, 32], strides = [1, 1]} : vector<8x128xf32> to vector<8x32xf32>
    %103 = vector.extract_strided_slice %100 {offsets = [0, 64], sizes = [8, 32], strides = [1, 1]} : vector<8x128xf32> to vector<8x32xf32>
    %104 = vector.extract_strided_slice %100 {offsets = [0, 96], sizes = [8, 32], strides = [1, 1]} : vector<8x128xf32> to vector<8x32xf32>
    %105 = arith.mulf %102, %88 : vector<8x32xf32>
    %106 = arith.mulf %101, %103 : vector<8x32xf32>
    %107 = arith.addf %105, %106 : vector<8x32xf32>
    %108 = math.tanh %107 : vector<8x32xf32>
    %109 = arith.mulf %104, %108 : vector<8x32xf32>
    %110 = vector.extract_strided_slice %11 {offsets = [40, 0], sizes = [8, 128], strides = [1, 1]} : vector<64x128xf32> to vector<8x128xf32>
    %cst_16 = arith.constant dense<0.000000e+00> : vector<8x128xf32>
    %111 = tpu.matmul %109, %12, %cst_16 {dimension_numbers = #tpu.dot_dimension_numbers<[1], [0], [0], [1], [0, 0, 1, 1], [], []>} : vector<8x32xf32>, vector<32x128xf32>, vector<8x128xf32> -> vector<8x128xf32>
    %112 = arith.addf %110, %111 : vector<8x128xf32>
    %113 = vector.broadcast %2 : vector<1x128xf32> to vector<8x128xf32>
    %114 = arith.mulf %112, %113 : vector<8x128xf32>
    %115 = math.tanh %114 : vector<8x128xf32>
    %116 = vector.broadcast %2 : vector<1x128xf32> to vector<8x128xf32>
    %117 = arith.mulf %115, %116 : vector<8x128xf32>
    %118 = vector.broadcast %3 : vector<1x128xf32> to vector<8x128xf32>
    %119 = arith.addf %117, %118 : vector<8x128xf32>
    %120 = vector.extract_strided_slice %119 {offsets = [0, 0], sizes = [8, 32], strides = [1, 1]} : vector<8x128xf32> to vector<8x32xf32>
    %121 = vector.extract_strided_slice %119 {offsets = [0, 32], sizes = [8, 32], strides = [1, 1]} : vector<8x128xf32> to vector<8x32xf32>
    %122 = vector.extract_strided_slice %119 {offsets = [0, 64], sizes = [8, 32], strides = [1, 1]} : vector<8x128xf32> to vector<8x32xf32>
    %123 = vector.extract_strided_slice %119 {offsets = [0, 96], sizes = [8, 32], strides = [1, 1]} : vector<8x128xf32> to vector<8x32xf32>
    %124 = arith.mulf %121, %107 : vector<8x32xf32>
    %125 = arith.mulf %120, %122 : vector<8x32xf32>
    %126 = arith.addf %124, %125 : vector<8x32xf32>
    %127 = math.tanh %126 : vector<8x32xf32>
    %128 = arith.mulf %123, %127 : vector<8x32xf32>
    %129 = vector.extract_strided_slice %11 {offsets = [48, 0], sizes = [8, 128], strides = [1, 1]} : vector<64x128xf32> to vector<8x128xf32>
    %cst_17 = arith.constant dense<0.000000e+00> : vector<8x128xf32>
    %130 = tpu.matmul %128, %12, %cst_17 {dimension_numbers = #tpu.dot_dimension_numbers<[1], [0], [0], [1], [0, 0, 1, 1], [], []>} : vector<8x32xf32>, vector<32x128xf32>, vector<8x128xf32> -> vector<8x128xf32>
    %131 = arith.addf %129, %130 : vector<8x128xf32>
    %132 = vector.broadcast %2 : vector<1x128xf32> to vector<8x128xf32>
    %133 = arith.mulf %131, %132 : vector<8x128xf32>
    %134 = math.tanh %133 : vector<8x128xf32>
    %135 = vector.broadcast %2 : vector<1x128xf32> to vector<8x128xf32>
    %136 = arith.mulf %134, %135 : vector<8x128xf32>
    %137 = vector.broadcast %3 : vector<1x128xf32> to vector<8x128xf32>
    %138 = arith.addf %136, %137 : vector<8x128xf32>
    %139 = vector.extract_strided_slice %138 {offsets = [0, 0], sizes = [8, 32], strides = [1, 1]} : vector<8x128xf32> to vector<8x32xf32>
    %140 = vector.extract_strided_slice %138 {offsets = [0, 32], sizes = [8, 32], strides = [1, 1]} : vector<8x128xf32> to vector<8x32xf32>
    %141 = vector.extract_strided_slice %138 {offsets = [0, 64], sizes = [8, 32], strides = [1, 1]} : vector<8x128xf32> to vector<8x32xf32>
    %142 = vector.extract_strided_slice %138 {offsets = [0, 96], sizes = [8, 32], strides = [1, 1]} : vector<8x128xf32> to vector<8x32xf32>
    %143 = arith.mulf %140, %126 : vector<8x32xf32>
    %144 = arith.mulf %139, %141 : vector<8x32xf32>
    %145 = arith.addf %143, %144 : vector<8x32xf32>
    %146 = math.tanh %145 : vector<8x32xf32>
    %147 = arith.mulf %142, %146 : vector<8x32xf32>
    %148 = vector.extract_strided_slice %11 {offsets = [56, 0], sizes = [8, 128], strides = [1, 1]} : vector<64x128xf32> to vector<8x128xf32>
    %cst_18 = arith.constant dense<0.000000e+00> : vector<8x128xf32>
    %149 = tpu.matmul %147, %12, %cst_18 {dimension_numbers = #tpu.dot_dimension_numbers<[1], [0], [0], [1], [0, 0, 1, 1], [], []>} : vector<8x32xf32>, vector<32x128xf32>, vector<8x128xf32> -> vector<8x128xf32>
    %150 = arith.addf %148, %149 : vector<8x128xf32>
    %151 = vector.broadcast %2 : vector<1x128xf32> to vector<8x128xf32>
    %152 = arith.mulf %150, %151 : vector<8x128xf32>
    %153 = math.tanh %152 : vector<8x128xf32>
    %154 = vector.broadcast %2 : vector<1x128xf32> to vector<8x128xf32>
    %155 = arith.mulf %153, %154 : vector<8x128xf32>
    %156 = vector.broadcast %3 : vector<1x128xf32> to vector<8x128xf32>
    %157 = arith.addf %155, %156 : vector<8x128xf32>
    %158 = vector.extract_strided_slice %157 {offsets = [0, 0], sizes = [8, 32], strides = [1, 1]} : vector<8x128xf32> to vector<8x32xf32>
    %159 = vector.extract_strided_slice %157 {offsets = [0, 32], sizes = [8, 32], strides = [1, 1]} : vector<8x128xf32> to vector<8x32xf32>
    %160 = vector.extract_strided_slice %157 {offsets = [0, 64], sizes = [8, 32], strides = [1, 1]} : vector<8x128xf32> to vector<8x32xf32>
    %161 = vector.extract_strided_slice %157 {offsets = [0, 96], sizes = [8, 32], strides = [1, 1]} : vector<8x128xf32> to vector<8x32xf32>
    %162 = arith.mulf %159, %145 : vector<8x32xf32>
    %163 = arith.mulf %158, %160 : vector<8x32xf32>
    %164 = arith.addf %162, %163 : vector<8x32xf32>
    %165 = math.tanh %164 : vector<8x32xf32>
    %166 = arith.mulf %161, %165 : vector<8x32xf32>
    %167 = vector.broadcast %4 : vector<1x32xf32> to vector<8x32xf32>
    %168 = arith.mulf %166, %167 : vector<8x32xf32>
    %cst_19 = arith.constant dense<0.000000e+00> : vector<8xf32>
    %169 = vector.multi_reduction <add>, %168, %cst_19 [1] : vector<8x32xf32> to vector<8xf32>
    %170 = vector.shape_cast %169 : vector<8xf32> to vector<8x1xf32>
    %171 = vector.broadcast %5 : vector<1x1xf32> to vector<8x1xf32>
    %172 = arith.addf %170, %171 : vector<8x1xf32>
    %c0_20 = arith.constant 0 : index
    %c0_21 = arith.constant 0 : index
    %173 = vector.load %arg3[%c0_20, %c0_21] : memref<8x1xf32, #tpu.memory_space<vmem>>, vector<8x1xf32>
    tpu.vector_store %arg3[%c0_20, %c0_21], %172 {strides = array<i32>} : memref<8x1xf32, #tpu.memory_space<vmem>>, vector<8x1xf32>,
    return
  }
}

</mosaic_0001>

<llo_original>
// kernel: stock_predictor_forward.1
$region0: #{stock_predictor_forward.1}
  #allocation0 [shape = 'u32[]', space=smem, size = 0x4, offset = 0x4, fixed_abs, tag = 'smem constant byte address 0x4 - core index']
  #allocation1 [shape = 'u32[72,128]{1,0:T(1,128)}', space=vmem, size = 0x9000, scoped, tag = 'internal scratch']
  %s0 = inlined_call_operand.vmem [shape: f32[64,1], index: 0, kind: input, shape index: {}]
  %s1 = inlined_call_operand.vmem [shape: f32[32,128], index: 1, kind: input, shape index: {}]
  %s2 = inlined_call_operand.vmem [shape: f32[6,128], index: 2, kind: input, shape index: {}]
  %s3 = inlined_call_operand.vmem [shape: f32[8,1], index: 3, kind: output, shape index: {}]
  %s4 = sld [smem:[#allocation0]]
  $region22: #{stock_predictor_forward.1} parent=0
    _
  %s6 = ssub.s32 1, %s4
  %s7 = scalar_select 0, %s6, %s4
  // Predicated region
  $region2: #{stock_predictor_forward.1} parent=0 // pred_check
    _
  $region3: #{stock_predictor_forward.1} parent=0 // pred_check_branch
    %9 = sbr.rel (0) target = $region5
  $region4: #{stock_predictor_forward.1} parent=0 // pred_region
    _
  $region5: #{stock_predictor_forward.1} parent=0 // pred_fallthru
    _
  // Predicated region
  $region6: #{stock_predictor_forward.1} parent=0 // pred_check
    _
  $region7: #{stock_predictor_forward.1} parent=0 // pred_check_branch
    %11 = sbr.rel (0) target = $region9
  $region8: #{stock_predictor_forward.1} parent=0 // pred_region
    _
  $region9: #{stock_predictor_forward.1} parent=0 // pred_fallthru
    _
  // Predicated region
  $region10: #{stock_predictor_forward.1} parent=0 // pred_check
    _
  $region11: #{stock_predictor_forward.1} parent=0 // pred_check_branch
    %13 = sbr.rel (0) target = $region13
  $region12: #{stock_predictor_forward.1} parent=0 // pred_region
    _
  $region13: #{stock_predictor_forward.1} parent=0 // pred_fallthru
    _
  %v14 = vld [vmem:[%s2] sm:$0x1]
  %v15 = vld [vmem:[%s2 + $0x1] sm:$0x1]
  %v16 = vld [vmem:[%s2 + $0x2] sm:$0x1]
  %v17 = vld [vmem:[%s2 + $0x3] sm:$0x1]
  %v18 = vld [vmem:[%s2 + $0x4] sm:$0x1]
  %v19 = vld [vmem:[%s2 + $0x5] sm:$0x1]
  %v20 = vld [vmem:[%s0] sm:$0xff]
  %v21 = vld [vmem:[%s0 + $0x8] sm:$0xff]
  %v22 = vld [vmem:[%s0 + $0x10] sm:$0xff]
  %v23 = vld [vmem:[%s0 + $0x18] sm:$0xff]
  %v24 = vld [vmem:[%s0 + $0x20] sm:$0xff]
  %v25 = vld [vmem:[%s0 + $0x28] sm:$0xff]
  %v26 = vld [vmem:[%s0 + $0x30] sm:$0xff]
  %v27 = vld [vmem:[%s0 + $0x38] sm:$0xff]
  %29 = vset.pattern.permute.xlu0 0
  %30 = vperm.xlu0 %29, %v20
  %v31 = vpop.permute.xlu0 %30
  %34 = vset.pattern.permute.xlu0 0
  %35 = vperm.xlu0 %34, %v21
  %v36 = vpop.permute.xlu0 %35
  %39 = vset.pattern.permute.xlu0 0
  %40 = vperm.xlu0 %39, %v22
  %v41 = vpop.permute.xlu0 %40
  %44 = vset.pattern.permute.xlu0 0
  %45 = vperm.xlu0 %44, %v23
  %v46 = vpop.permute.xlu0 %45
  %49 = vset.pattern.permute.xlu0 0
  %50 = vperm.xlu0 %49, %v24
  %v51 = vpop.permute.xlu0 %50
  %54 = vset.pattern.permute.xlu0 0
  %55 = vperm.xlu0 %54, %v25
  %v56 = vpop.permute.xlu0 %55
  %59 = vset.pattern.permute.xlu0 0
  %60 = vperm.xlu0 %59, %v26
  %v61 = vpop.permute.xlu0 %60
  %64 = vset.pattern.permute.xlu0 0
  %65 = vperm.xlu0 %64, %v27
  %v66 = vpop.permute.xlu0 %65
  %v68 = vperm.slane %v14, 0
  %v69 = vmul.f32 %v31, %v68
  %v70 = vmul.f32 %v36, %v68
  %v71 = vmul.f32 %v41, %v68
  %v72 = vmul.f32 %v46, %v68
  %v73 = vmul.f32 %v51, %v68
  %v74 = vmul.f32 %v56, %v68
  %v75 = vmul.f32 %v61, %v68
  %v76 = vmul.f32 %v66, %v68
  %v77 = vperm.slane %v15, 0
  %v78 = vadd.f32 %v69, %v77
  %v79 = vadd.f32 %v70, %v77
  %v80 = vadd.f32 %v71, %v77
  %v81 = vadd.f32 %v72, %v77
  %v82 = vadd.f32 %v73, %v77
  %v83 = vadd.f32 %v74, %v77
  %v84 = vadd.f32 %v75, %v77
  %v85 = vadd.f32 %v76, %v77
  %v86 = vld [vmem:[%s1] sm:$0xff]
  %v87 = vld [vmem:[%s1 + $0x8] sm:$0xff]
  %v88 = vld [vmem:[%s1 + $0x10] sm:$0xff]
  %v89 = vld [vmem:[%s1 + $0x18] sm:$0xff]
  %vm90 = vcmask 261120
  %v92 = vsel %vm90, 0.0, 0
  %94 = vmatpush.msra.mxu0 0.0
  %95 = vmatpush.msra.mxu0 0.0
  %96 = vmatpush.msra.mxu0 0.0
  %97 = vmatpush.msra.mxu0 0.0
  %98 = vmatpush.msra.mxu0 0.0
  %99 = vmatpush.msra.mxu0 0.0
  %100 = vmatpush.msra.mxu0 0.0
  %101 = vmatpush.msra.mxu0 0.0
  %102 = vmatpush.msra.mxu0 0.0
  %103 = vmatpush.msra.mxu0 0.0
  %104 = vmatpush.msra.mxu0 0.0
  %105 = vmatpush.msra.mxu0 0.0
  %106 = vmatpush.msra.mxu0 %v89
  %107 = vmatpush.msra.mxu0 %v88
  %108 = vmatpush.msra.mxu0 %v87
  %109 = vmatpush.msra.mxu0 %v86
  %110 = vmatmul.f32.gmra.mxu0 %v92
  %v111 = vpop.f32.mrf.mxu0
  %v112 = vadd.f32 0.0, %v111
  %113 = vdwg.mxu0
  %v114 = vadd.f32 %v78, %v112
  %v115 = vperm.slane %v16, 0
  %v116 = vmul.f32 %v114, %v115
  %v117 = vtanh.pop %v116
  %v118 = vmul.f32 %v117, %v115
  %v119 = vperm.slane %v17, 0
  %v120 = vadd.f32 %v118, %v119
  %v121 = vmul.f32 %v120, 0.0
  %123 = vrot.lane.b32.xlu0 %v120, 64
  %v124 = vpop.permute.xlu0 %123
  %v126 = vmul.f32 %v120, %v124
  %128 = vrot.lane.b32.xlu0 %v126, 32
  %v129 = vpop.permute.xlu0 %128
  %v131 = vadd.f32 %v121, %v129
  %v132 = vtanh.pop %v131
  %134 = vrot.lane.b32.xlu0 %v132, 64
  %v135 = vpop.permute.xlu0 %134
  %v137 = vmul.f32 %v120, %v135
  %139 = vrot.lane.b32.xlu0 %v137, 32
  %v140 = vpop.permute.xlu0 %139
  %v141 = vsel %vm90, %v140, 0
  %143 = vmatpush.msra.mxu0 0.0
  %144 = vmatpush.msra.mxu0 0.0
  %145 = vmatpush.msra.mxu0 0.0
  %146 = vmatpush.msra.mxu0 0.0
  %147 = vmatpush.msra.mxu0 0.0
  %148 = vmatpush.msra.mxu0 0.0
  %149 = vmatpush.msra.mxu0 0.0
  %150 = vmatpush.msra.mxu0 0.0
  %151 = vmatpush.msra.mxu0 0.0
  %152 = vmatpush.msra.mxu0 0.0
  %153 = vmatpush.msra.mxu0 0.0
  %154 = vmatpush.msra.mxu0 0.0
  %155 = vmatpush.msra.mxu0 %v89
  %156 = vmatpush.msra.mxu0 %v88
  %157 = vmatpush.msra.mxu0 %v87
  %158 = vmatpush.msra.mxu0 %v86
  %159 = vmatmul.f32.gmra.mxu0 %v141
  %v160 = vpop.f32.mrf.mxu0
  %v161 = vadd.f32 0.0, %v160
  %162 = vdwg.mxu0
  %v163 = vadd.f32 %v79, %v161
  %v164 = vmul.f32 %v163, %v115
  %v165 = vtanh.pop %v164
  %v166 = vmul.f32 %v165, %v115
  %v167 = vadd.f32 %v166, %v119
  %v168 = vmul.f32 %v167, %v131
  %170 = vrot.lane.b32.xlu0 %v167, 64
  %v171 = vpop.permute.xlu0 %170
  %v173 = vmul.f32 %v167, %v171
  %175 = vrot.lane.b32.xlu0 %v173, 32
  %v176 = vpop.permute.xlu0 %175
  %v178 = vadd.f32 %v168, %v176
  %v179 = vtanh.pop %v178
  %181 = vrot.lane.b32.xlu0 %v179, 64
  %v182 = vpop.permute.xlu0 %181
  %v184 = vmul.f32 %v167, %v182
  %186 = vrot.lane.b32.xlu0 %v184, 32
  %v187 = vpop.permute.xlu0 %186
  %v188 = vsel %vm90, %v187, 0
  %190 = vmatpush.msra.mxu0 0.0
  %191 = vmatpush.msra.mxu0 0.0
  %192 = vmatpush.msra.mxu0 0.0
  %193 = vmatpush.msra.mxu0 0.0
  %194 = vmatpush.msra.mxu0 0.0
  %195 = vmatpush.msra.mxu0 0.0
  %196 = vmatpush.msra.mxu0 0.0
  %197 = vmatpush.msra.mxu0 0.0
  %198 = vmatpush.msra.mxu0 0.0
  %199 = vmatpush.msra.mxu0 0.0
  %200 = vmatpush.msra.mxu0 0.0
  %201 = vmatpush.msra.mxu0 0.0
  %202 = vmatpush.msra.mxu0 %v89
  %203 = vmatpush.msra.mxu0 %v88
  %204 = vmatpush.msra.mxu0 %v87
  %205 = vmatpush.msra.mxu0 %v86
  %206 = vmatmul.f32.gmra.mxu0 %v188
  %v207 = vpop.f32.mrf.mxu0
  %v208 = vadd.f32 0.0, %v207
  %209 = vdwg.mxu0
  %v210 = vadd.f32 %v80, %v208
  %v211 = vmul.f32 %v210, %v115
  %v212 = vtanh.pop %v211
  %v213 = vmul.f32 %v212, %v115
  %v214 = vadd.f32 %v213, %v119
  %v215 = vmul.f32 %v214, %v178
  %217 = vrot.lane.b32.xlu0 %v214, 64
  %v218 = vpop.permute.xlu0 %217
  %v220 = vmul.f32 %v214, %v218
  %222 = vrot.lane.b32.xlu0 %v220, 32
  %v223 = vpop.permute.xlu0 %222
  %v225 = vadd.f32 %v215, %v223
  %v226 = vtanh.pop %v225
  %228 = vrot.lane.b32.xlu0 %v226, 64
  %v229 = vpop.permute.xlu0 %228
  %v231 = vmul.f32 %v214, %v229
  %233 = vrot.lane.b32.xlu0 %v231, 32
  %v234 = vpop.permute.xlu0 %233
  %v235 = vsel %vm90, %v234, 0
  %237 = vmatpush.msra.mxu0 0.0
  %238 = vmatpush.msra.mxu0 0.0
  %239 = vmatpush.msra.mxu0 0.0
  %240 = vmatpush.msra.mxu0 0.0
  %241 = vmatpush.msra.mxu0 0.0
  %242 = vmatpush.msra.mxu0 0.0
  %243 = vmatpush.msra.mxu0 0.0
  %244 = vmatpush.msra.mxu0 0.0
  %245 = vmatpush.msra.mxu0 0.0
  %246 = vmatpush.msra.mxu0 0.0
  %247 = vmatpush.msra.mxu0 0.0
  %248 = vmatpush.msra.mxu0 0.0
  %249 = vmatpush.msra.mxu0 %v89
  %250 = vmatpush.msra.mxu0 %v88
  %251 = vmatpush.msra.mxu0 %v87
  %252 = vmatpush.msra.mxu0 %v86
  %253 = vmatmul.f32.gmra.mxu0 %v235
  %v254 = vpop.f32.mrf.mxu0
  %v255 = vadd.f32 0.0, %v254
  %256 = vdwg.mxu0
  %v257 = vadd.f32 %v81, %v255
  %v258 = vmul.f32 %v257, %v115
  %v259 = vtanh.pop %v258
  %v260 = vmul.f32 %v259, %v115
  %v261 = vadd.f32 %v260, %v119
  %v262 = vmul.f32 %v261, %v225
  %264 = vrot.lane.b32.xlu0 %v261, 64
  %v265 = vpop.permute.xlu0 %264
  %v267 = vmul.f32 %v261, %v265
  %269 = vrot.lane.b32.xlu0 %v267, 32
  %v270 = vpop.permute.xlu0 %269
  %v272 = vadd.f32 %v262, %v270
  %v273 = vtanh.pop %v272
  %275 = vrot.lane.b32.xlu0 %v273, 64
  %v276 = vpop.permute.xlu0 %275
  %v278 = vmul.f32 %v261, %v276
  %280 = vrot.lane.b32.xlu0 %v278, 32
  %v281 = vpop.permute.xlu0 %280
  %v282 = vsel %vm90, %v281, 0
  %284 = vmatpush.msra.mxu0 0.0
  %285 = vmatpush.msra.mxu0 0.0
  %286 = vmatpush.msra.mxu0 0.0
  %287 = vmatpush.msra.mxu0 0.0
  %288 = vmatpush.msra.mxu0 0.0
  %289 = vmatpush.msra.mxu0 0.0
  %290 = vmatpush.msra.mxu0 0.0
  %291 = vmatpush.msra.mxu0 0.0
  %292 = vmatpush.msra.mxu0 0.0
  %293 = vmatpush.msra.mxu0 0.0
  %294 = vmatpush.msra.mxu0 0.0
  %295 = vmatpush.msra.mxu0 0.0
  %296 = vmatpush.msra.mxu0 %v89
  %297 = vmatpush.msra.mxu0 %v88
  %298 = vmatpush.msra.mxu0 %v87
  %299 = vmatpush.msra.mxu0 %v86
  %300 = vmatmul.f32.gmra.mxu0 %v282
  %v301 = vpop.f32.mrf.mxu0
  %v302 = vadd.f32 0.0, %v301
  %303 = vdwg.mxu0
  %v304 = vadd.f32 %v82, %v302
  %v305 = vmul.f32 %v304, %v115
  %v306 = vtanh.pop %v305
  %v307 = vmul.f32 %v306, %v115
  %v308 = vadd.f32 %v307, %v119
  %v309 = vmul.f32 %v308, %v272
  %311 = vrot.lane.b32.xlu0 %v308, 64
  %v312 = vpop.permute.xlu0 %311
  %v314 = vmul.f32 %v308, %v312
  %316 = vrot.lane.b32.xlu0 %v314, 32
  %v317 = vpop.permute.xlu0 %316
  %v319 = vadd.f32 %v309, %v317
  %v320 = vtanh.pop %v319
  %322 = vrot.lane.b32.xlu0 %v320, 64
  %v323 = vpop.permute.xlu0 %322
  %v325 = vmul.f32 %v308, %v323
  %327 = vrot.lane.b32.xlu0 %v325, 32
  %v328 = vpop.permute.xlu0 %327
  %v329 = vsel %vm90, %v328, 0
  %331 = vmatpush.msra.mxu0 0.0
  %332 = vmatpush.msra.mxu0 0.0
  %333 = vmatpush.msra.mxu0 0.0
  %334 = vmatpush.msra.mxu0 0.0
  %335 = vmatpush.msra.mxu0 0.0
  %336 = vmatpush.msra.mxu0 0.0
  %337 = vmatpush.msra.mxu0 0.0
  %338 = vmatpush.msra.mxu0 0.0
  %339 = vmatpush.msra.mxu0 0.0
  %340 = vmatpush.msra.mxu0 0.0
  %341 = vmatpush.msra.mxu0 0.0
  %342 = vmatpush.msra.mxu0 0.0
  %343 = vmatpush.msra.mxu0 %v89
  %344 = vmatpush.msra.mxu0 %v88
  %345 = vmatpush.msra.mxu0 %v87
  %346 = vmatpush.msra.mxu0 %v86
  %347 = vmatmul.f32.gmra.mxu0 %v329
  %v348 = vpop.f32.mrf.mxu0
  %v349 = vadd.f32 0.0, %v348
  %350 = vdwg.mxu0
  %v351 = vadd.f32 %v83, %v349
  %v352 = vmul.f32 %v351, %v115
  %v353 = vtanh.pop %v352
  %v354 = vmul.f32 %v353, %v115
  %v355 = vadd.f32 %v354, %v119
  %v356 = vmul.f32 %v355, %v319
  %358 = vrot.lane.b32.xlu0 %v355, 64
  %v359 = vpop.permute.xlu0 %358
  %v361 = vmul.f32 %v355, %v359
  %363 = vrot.lane.b32.xlu0 %v361, 32
  %v364 = vpop.permute.xlu0 %363
  %v366 = vadd.f32 %v356, %v364
  %v367 = vtanh.pop %v366
  %369 = vrot.lane.b32.xlu0 %v367, 64
  %v370 = vpop.permute.xlu0 %369
  %v372 = vmul.f32 %v355, %v370
  %374 = vrot.lane.b32.xlu0 %v372, 32
  %v375 = vpop.permute.xlu0 %374
  %v376 = vsel %vm90, %v375, 0
  %378 = vmatpush.msra.mxu0 0.0
  %379 = vmatpush.msra.mxu0 0.0
  %380 = vmatpush.msra.mxu0 0.0
  %381 = vmatpush.msra.mxu0 0.0
  %382 = vmatpush.msra.mxu0 0.0
  %383 = vmatpush.msra.mxu0 0.0
  %384 = vmatpush.msra.mxu0 0.0
  %385 = vmatpush.msra.mxu0 0.0
  %386 = vmatpush.msra.mxu0 0.0
  %387 = vmatpush.msra.mxu0 0.0
  %388 = vmatpush.msra.mxu0 0.0
  %389 = vmatpush.msra.mxu0 0.0
  %390 = vmatpush.msra.mxu0 %v89
  %391 = vmatpush.msra.mxu0 %v88
  %392 = vmatpush.msra.mxu0 %v87
  %393 = vmatpush.msra.mxu0 %v86
  %394 = vmatmul.f32.gmra.mxu0 %v376
  %v395 = vpop.f32.mrf.mxu0
  %v396 = vadd.f32 0.0, %v395
  %397 = vdwg.mxu0
  %v398 = vadd.f32 %v84, %v396
  %v399 = vmul.f32 %v398, %v115
  %v400 = vtanh.pop %v399
  %v401 = vmul.f32 %v400, %v115
  %v402 = vadd.f32 %v401, %v119
  %v403 = vmul.f32 %v402, %v366
  %405 = vrot.lane.b32.xlu0 %v402, 64
  %v406 = vpop.permute.xlu0 %405
  %v408 = vmul.f32 %v402, %v406
  %410 = vrot.lane.b32.xlu0 %v408, 32
  %v411 = vpop.permute.xlu0 %410
  %v413 = vadd.f32 %v403, %v411
  %v414 = vtanh.pop %v413
  %416 = vrot.lane.b32.xlu0 %v414, 64
  %v417 = vpop.permute.xlu0 %416
  %v419 = vmul.f32 %v402, %v417
  %421 = vrot.lane.b32.xlu0 %v419, 32
  %v422 = vpop.permute.xlu0 %421
  %v423 = vsel %vm90, %v422, 0
  %425 = vmatpush.msra.mxu0 0.0
  %426 = vmatpush.msra.mxu0 0.0
  %427 = vmatpush.msra.mxu0 0.0
  %428 = vmatpush.msra.mxu0 0.0
  %429 = vmatpush.msra.mxu0 0.0
  %430 = vmatpush.msra.mxu0 0.0
  %431 = vmatpush.msra.mxu0 0.0
  %432 = vmatpush.msra.mxu0 0.0
  %433 = vmatpush.msra.mxu0 0.0
  %434 = vmatpush.msra.mxu0 0.0
  %435 = vmatpush.msra.mxu0 0.0
  %436 = vmatpush.msra.mxu0 0.0
  %437 = vmatpush.msra.mxu0 %v89
  %438 = vmatpush.msra.mxu0 %v88
  %439 = vmatpush.msra.mxu0 %v87
  %440 = vmatpush.msra.mxu0 %v86
  %441 = vmatmul.f32.gmra.mxu0 %v423
  %v442 = vpop.f32.mrf.mxu0
  %v443 = vadd.f32 0.0, %v442
  %444 = vdwg.mxu0
  %v445 = vadd.f32 %v85, %v443
  %v446 = vmul.f32 %v445, %v115
  %v447 = vtanh.pop %v446
  %v448 = vmul.f32 %v447, %v115
  %v449 = vadd.f32 %v448, %v119
  %v450 = vmul.f32 %v449, %v413
  %452 = vrot.lane.b32.xlu0 %v449, 64
  %v453 = vpop.permute.xlu0 %452
  %v455 = vmul.f32 %v449, %v453
  %457 = vrot.lane.b32.xlu0 %v455, 32
  %v458 = vpop.permute.xlu0 %457
  %v460 = vadd.f32 %v450, %v458
  %v461 = vtanh.pop %v460
  %463 = vrot.lane.b32.xlu0 %v461, 64
  %v464 = vpop.permute.xlu0 %463
  %v466 = vmul.f32 %v449, %v464
  %v467 = vperm.slane %v18, 0
  %469 = vrot.lane.b32.xlu0 %v467, 96
  %v470 = vpop.permute.xlu0 %469
  %v472 = vmul.f32 %v466, %v470
  %474 = vrot.lane.b32.xlu0 %v472, 32
  %v475 = vpop.permute.xlu0 %474
  %v477 = vsel %vm90, %v475, 0.0
  %478 = vadd.xlane.f32.xlu0 %v477
  %v479 = vpop.xlane.xlu0 %478
  %v480 = vperm.slane %v19, 0
  %v481 = vadd.f32 %v479, %v480
  %vm482 = vcmask 7168
  %483 = vst.msk [vmem:[%s3] sm:$0xff] %vm482, %v481
  // Predicated region
  $region14: #{stock_predictor_forward.1} parent=0 // pred_check
    _
  $region15: #{stock_predictor_forward.1} parent=0 // pred_check_branch
    %485 = sbr.rel (0) target = $region17
  $region16: #{stock_predictor_forward.1} parent=0 // pred_region
    _
  $region17: #{stock_predictor_forward.1} parent=0 // pred_fallthru
    _
  // Predicated region
  $region18: #{stock_predictor_forward.1} parent=0 // pred_check
    _
  $region19: #{stock_predictor_forward.1} parent=0 // pred_check_branch
    %487 = sbr.rel (0) target = $region21
  $region20: #{stock_predictor_forward.1} parent=0 // pred_region
    _
  $region21: #{stock_predictor_forward.1} parent=0 // pred_fallthru
    _

</llo_original>
